<compile_context>
chip_gen: v7x
topology: tpu7x:2x2x1
jax: 0.10.0
libtpu: 0.0.40
codegen_flags: <defaults>
</compile_context>

<pallas_src>
import jax
import jax.numpy as jnp
from jax.experimental import pallas as pl
from jax.experimental.pallas import tpu as pltpu


# ----------------------------------------------------------------------------
# higp_lib helper ops (JAX reimplementation, shared by wrapper and reference).
# ----------------------------------------------------------------------------
def maybe_cat_exog(x, u):
    """Concatenate exogenous u to x along the feature dim (broadcast over nodes)."""
    if u is None:
        return x
    if u.ndim == x.ndim - 1:  # [B, T, Fu] -> broadcast over the node dim
        # TODO(synk): time-only exogenous could be folded as a per-(b,t) bias
        #             instead of materializing the node broadcast in HBM.
        u = jnp.broadcast_to(u[..., None, :], x.shape[:-1] + (u.shape[-1],))
    return jnp.concatenate([x, u], axis=-1)


def compute_aggregation_matrix(selects, bottom_up=False):
    """C maps bottom-level nodes to every aggregated node of levels 1..L-1."""
    # TODO(synk): exact higp_lib normalization convention unavailable; this follows
    #             the standard HiGP mean-aggregation (column-normalized) behavior.
    C_l = selects[0]
    blocks = []
    for S in selects[1:]:
        C_l = C_l @ S
        blocks.append(C_l)
    C = jnp.concatenate(blocks, axis=-1)  # [N0, M]
    if not bottom_up:
        C = C / jnp.maximum(C.sum(axis=-2, keepdims=True), 1e-9)
    return C


def maybe_cat_emb(x, emb):
    """Concatenate a per-node embedding to x along the feature dim."""
    if emb is None:
        return x
    emb_b = jnp.broadcast_to(emb, x.shape[:-1] + (emb.shape[-1],))
    return jnp.concatenate([x, emb_b], axis=-1)


# ----------------------------------------------------------------------------
# Fused Pallas kernels
# ----------------------------------------------------------------------------
def _hier_kernel(x_ref, w_ref, a_ref, nbb_ref, nba_ref, ob_ref, oa_ref):
    # x_ref : [tb*N0, Fin]      w_ref : [Fin, H]
    # a_ref : [tb*M, tb*N0]     (block-diagonal kron(I_tb, C^T))
    # nbb_ref/ob_ref : [tb*N0, H]    nba_ref/oa_ref : [tb*M, H]
    z = jnp.dot(x_ref[...], w_ref[...], preferred_element_type=jnp.float32)
    ob_ref[...] = (z + nbb_ref[...]).astype(ob_ref.dtype)
    ya = jnp.dot(a_ref[...], z.astype(a_ref.dtype),
                 preferred_element_type=jnp.float32)
    oa_ref[...] = (ya + nba_ref[...]).astype(oa_ref.dtype)


def _hier_kernel_noagg(x_ref, w_ref, nbb_ref, ob_ref):
    z = jnp.dot(x_ref[...], w_ref[...], preferred_element_type=jnp.float32)
    ob_ref[...] = (z + nbb_ref[...]).astype(ob_ref.dtype)


def _choose_bt_tile(bt, n0, m, target_rows=512, a_budget=4 << 20):
    """How many (b, t) slices each grid step handles (tile rows = tb * n0)."""
    if bt * n0 <= 2 * target_rows:          # small problem: one grid step
        return bt
    tb = max(16, (target_rows // max(n0, 1)) // 16 * 16)
    # kron(I_tb, C^T) scales as tb^2; keep it well inside VMEM.
    while m > 0 and tb > 16 and (tb * m) * (tb * n0) * 4 > a_budget:
        tb -= 16
    # TODO(synk): for very large graphs (16*m * 16*n0 * 4 > a_budget even at
    #             tb=16) switch the aggregation to a per-(b,t) batched path.
    return min(tb, bt)


def hierarchy_forward_pallas(xu, w_in_t, ct, node_bias,
                             *, compute_dtype=jnp.float32):
    """Fused forward.

    xu        : [B, T, N0, Fin]  input with exogenous features concatenated
    w_in_t    : [Fin, H]         input/exog part of the Linear weight ([in, out])
    ct        : [M, N0] or None  aggregation matrix C^T for levels 1..L-1
    node_bias : [N0 + M, H]      per-node bias = emb @ W_emb^T + b

    Returns (y_bottom [B, T, N0, H], y_agg [B, T, M, H] or None), float32.
    """
    B, T, N0, Fin = xu.shape
    H = w_in_t.shape[-1]
    M = 0 if ct is None else int(ct.shape[0])
    BT = B * T
    cd = compute_dtype

    tb = _choose_bt_tile(BT, N0, M)
    bt_pad = -(-BT // tb) * tb
    grid = (bt_pad // tb,)
    rows_in = tb * N0

    # Flatten (b, t, n) rows; zero-pad the (b, t) axis (sliced off at the end).
    x3 = xu.reshape(BT, N0, Fin)
    if bt_pad != BT:
        x3 = jnp.pad(x3, ((0, bt_pad - BT), (0, 0), (0, 0)))
    x2 = x3.reshape(bt_pad * N0, Fin).astype(cd)

    nb_bot = jnp.tile(node_bias[:N0].astype(jnp.float32), (tb, 1))   # [tb*N0, H]

    if M > 0:
        rows_agg = tb * M
        # Block-diagonal aggregation over one tile of tb slices: kron(I_tb, C^T).
        a_blk = jnp.kron(jnp.eye(tb, dtype=jnp.float32),
                         ct.astype(jnp.float32)).astype(cd)          # [tb*M, tb*N0]
        nb_agg = jnp.tile(node_bias[N0:].astype(jnp.float32), (tb, 1))

        y_bot2, y_agg2 = pl.pallas_call(
            _hier_kernel,
            out_shape=(jax.ShapeDtypeStruct((bt_pad * N0, H), jnp.float32),
                       jax.ShapeDtypeStruct((bt_pad * M, H), jnp.float32)),
            grid=grid,
            in_specs=[
                pl.BlockSpec((rows_in, Fin), lambda i: (i, 0)),
                pl.BlockSpec((Fin, H), lambda i: (0, 0)),
                pl.BlockSpec((rows_agg, rows_in), lambda i: (0, 0)),
                pl.BlockSpec((rows_in, H), lambda i: (0, 0)),
                pl.BlockSpec((rows_agg, H), lambda i: (0, 0)),
            ],
            out_specs=(pl.BlockSpec((rows_in, H), lambda i: (i, 0)),
                       pl.BlockSpec((rows_agg, H), lambda i: (i, 0))),
            compiler_params=pltpu.CompilerParams(
                dimension_semantics=("parallel",)),
        )(x2, w_in_t.astype(cd), a_blk, nb_bot, nb_agg)
    else:
        y_bot2 = pl.pallas_call(
            _hier_kernel_noagg,
            out_shape=jax.ShapeDtypeStruct((bt_pad * N0, H), jnp.float32),
            grid=grid,
            in_specs=[
                pl.BlockSpec((rows_in, Fin), lambda i: (i, 0)),
                pl.BlockSpec((Fin, H), lambda i: (0, 0)),
                pl.BlockSpec((rows_in, H), lambda i: (0, 0)),
            ],
            out_specs=pl.BlockSpec((rows_in, H), lambda i: (i, 0)),
            compiler_params=pltpu.CompilerParams(
                dimension_semantics=("parallel",)),
        )(x2, w_in_t.astype(cd), nb_bot)
        y_agg2 = None

    y_bot = y_bot2.reshape(bt_pad, N0, H)[:BT].reshape(B, T, N0, H)
    y_agg = None
    if M > 0:
        y_agg = y_agg2.reshape(bt_pad, M, H)[:BT].reshape(B, T, M, H)
    return y_bot, y_agg


# ----------------------------------------------------------------------------
# HierarchyEncoder
# ----------------------------------------------------------------------------
class HierarchyEncoderPallas:
    """Pallas-TPU implementation of higp_lib HierarchyEncoder.forward."""

    def __init__(self, input_size, hidden_size, emb_size, exog_size=0,
                 *, key=None, compute_dtype=jnp.float32):
        if key is None:
            key = jax.random.PRNGKey(42)
        self.input_size = input_size
        self.exog_size = exog_size
        self.emb_size = emb_size
        self.hidden_size = hidden_size
        self.compute_dtype = compute_dtype
        total_in = input_size + exog_size + emb_size
        kw, kb = jax.random.split(key)
        bound = 1.0 / float(total_in) ** 0.5
        # PyTorch nn.Linear parameterization: weight [out, in], bias [out].
        self.weight = jax.random.uniform(
            kw, (hidden_size, total_in), minval=-bound, maxval=bound,
            dtype=jnp.float32)
        self.bias = jax.random.uniform(
            kb, (hidden_size,), minval=-bound, maxval=bound, dtype=jnp.float32)
        # Pre-transposed [in, out] copy so no per-call transpose hits HBM.
        self.weight_t = self.weight.T

    def __call__(self, x, u, embs, selects, cat_output=False):
        Fx, Fu, H = self.input_size, self.exog_size, self.hidden_size
        wt = self.weight_t
        we_t = wt[Fx + Fu:]                      # embedding columns of W^T

        if Fu == 0:
            u = None
        if u is not None:
            xu = maybe_cat_exog(x, u)            # [B, T, N0, Fx + Fu]
            w_in_t = wt[:Fx + Fu]
        else:
            xu = x
            w_in_t = wt[:Fx]

        N0 = int(x.shape[-2])
        sizes = [N0] + [int(s.shape[-1]) for s in selects[1:]]
        Ntot = sum(sizes)

        ct = None
        if len(selects) > 1:
            C = compute_aggregation_matrix(selects, bottom_up=False)  # [N0, M]
            ct = C.T                                                  # [M, N0]

        # Per-node bias: emb @ W_emb^T + b (tiny, computed once in plain JAX).
        if self.emb_size > 0:
            emb_all = jnp.concatenate(list(embs), axis=0)             # [Ntot, E]
            node_bias = (emb_all.astype(jnp.float32)
                         @ we_t.astype(jnp.float32) + self.bias)
        else:
            node_bias = jnp.broadcast_to(self.bias, (Ntot, H))

        y_bot, y_agg = hierarchy_forward_pallas(
            xu, w_in_t, ct, node_bias, compute_dtype=self.compute_dtype)

        if cat_output:
            if y_agg is None:
                return y_bot
            return jnp.concatenate([y_bot, y_agg], axis=-2)

        outs, off = [y_bot], 0
        for s in sizes[1:]:
            outs.append(y_agg[..., off:off + s, :])
            off += s
        return tuple(outs)


# ----------------------------------------------------------------------------
# Pure-JAX reference (unfused, mirrors the PyTorch module; correctness check)
# ----------------------------------------------------------------------------
def reference_forward(x, u, embs, selects, weight, bias, cat_output=False):
    x = maybe_cat_exog(x, u)
    C = compute_aggregation_matrix(selects, bottom_up=False)
    xs_agg = jnp.einsum('mn,btnf->btmf', C.T, x)
    sizes = [int(s.shape[-1]) for s in selects[1:]]
    xs, off = [], 0
    for s in sizes:
        xs.append(xs_agg[..., off:off + s, :])
        off += s
    xs = [x] + xs
    sizes = [int(x.shape[-2])] + sizes
    xs = [maybe_cat_emb(xi, e) for xi, e in zip(xs, embs)]
    xs = jnp.concatenate(xs, axis=-2)
    y = jnp.einsum('btnf,hf->btnh', xs, weight) + bias
    if not cat_output:
        outs, off = [], 0
        for s in sizes:
            outs.append(y[..., off:off + s, :])
            off += s
        return tuple(outs)
    return y


# ----------------------------------------------------------------------------
if __name__ == "__main__":
    key = jax.random.PRNGKey(0)
    keys = jax.random.split(key, 8)

    B, T = 2, 4
    N0, N1, N2 = 12, 4, 1          # 12 bottom nodes -> 4 clusters -> 1 root
    input_size, hidden_size, emb_size, exog_size = 4, 32, 8, 3

    x = jax.random.normal(keys[0], (B, T, N0, input_size), dtype=jnp.float32)
    u = jax.random.normal(keys[1], (B, T, N0, exog_size), dtype=jnp.float32)

    selects = [
        jnp.eye(N0, dtype=jnp.float32),                                 # bottom identity
        jax.nn.softmax(jax.random.normal(keys[2], (N0, N1)), axis=-1),  # level 0 -> 1
        jax.nn.softmax(jax.random.normal(keys[3], (N1, N2)), axis=-1),  # level 1 -> 2
    ]
    embs = [
        jax.random.normal(keys[4], (N0, emb_size), dtype=jnp.float32),
        jax.random.normal(keys[5], (N1, emb_size), dtype=jnp.float32),
        jax.random.normal(keys[6], (N2, emb_size), dtype=jnp.float32),
    ]

    enc = HierarchyEncoderPallas(input_size, hidden_size, emb_size, exog_size,
                                 key=keys[7])

    # --- float32 path, split output (module default) ---
    outs = jax.block_until_ready(enc(x, u, embs, selects, cat_output=False))
    refs = reference_forward(x, u, embs, selects, enc.weight, enc.bias,
                             cat_output=False)
    assert len(outs) == len(refs) == len(selects)
    for o, r in zip(outs, refs):
        assert o.shape == r.shape, (o.shape, r.shape)
        assert jnp.allclose(o, r, atol=2e-3, rtol=2e-3), \
            float(jnp.max(jnp.abs(o - r)))

    # --- float32 path, cat output ---
    y_cat = jax.block_until_ready(enc(x, u, embs, selects, cat_output=True))
    ref_cat = reference_forward(x, u, embs, selects, enc.weight, enc.bias,
                                cat_output=True)
    assert y_cat.shape == ref_cat.shape
    assert jnp.allclose(y_cat, ref_cat, atol=2e-3, rtol=2e-3), \
        float(jnp.max(jnp.abs(y_cat - ref_cat)))

    # --- bf16 compute path (MXU traffic/throughput win), cat output ---
    enc.compute_dtype = jnp.bfloat16
    y_bf16 = jax.block_until_ready(enc(x, u, embs, selects, cat_output=True))
    assert y_bf16.shape == ref_cat.shape
    assert float(jnp.max(jnp.abs(y_bf16 - ref_cat))) < 0.25

    print("KERNEL_OK")
</pallas_src>

<mosaic_0001>
module attributes {stable_mosaic.version = 11 : i64} {
  func.func @_hier_kernel(%arg0: i32, %arg1: memref<96x7xf32, #tpu.memory_space<vmem>>, %arg2: memref<7x32xf32, #tpu.memory_space<vmem>>, %arg3: memref<40x96xf32, #tpu.memory_space<vmem>>, %arg4: memref<96x32xf32, #tpu.memory_space<vmem>>, %arg5: memref<40x32xf32, #tpu.memory_space<vmem>>, %arg6: memref<96x32xf32, #tpu.memory_space<vmem>>, %arg7: memref<40x32xf32, #tpu.memory_space<vmem>>) attributes {dimension_semantics = [#tpu.dimension_semantics<parallel>], iteration_bounds = array<i64: 1>, scalar_prefetch = 0 : i64, scratch_operands = 0 : i64, tpu.core_type = #tpu.core_type<tc>, window_params = [{transform_indices = @transform_0, window_bounds = array<i64: 96, 7>}, {pipeline_mode = #tpu.pipeline_mode<synchronous>, transform_indices = @transform_1, window_bounds = array<i64: 7, 32>}, {pipeline_mode = #tpu.pipeline_mode<synchronous>, transform_indices = @transform_2, window_bounds = array<i64: 40, 96>}, {pipeline_mode = #tpu.pipeline_mode<synchronous>, transform_indices = @transform_3, window_bounds = array<i64: 96, 32>}, {pipeline_mode = #tpu.pipeline_mode<synchronous>, transform_indices = @transform_4, window_bounds = array<i64: 40, 32>}, {transform_indices = @transform_5, window_bounds = array<i64: 96, 32>}, {transform_indices = @transform_6, window_bounds = array<i64: 40, 32>}]} {
    %c0 = arith.constant 0 : index
    %c0_0 = arith.constant 0 : index
    %0 = vector.load %arg1[%c0, %c0_0] : memref<96x7xf32, #tpu.memory_space<vmem>>, vector<96x7xf32>
    %c0_1 = arith.constant 0 : index
    %c0_2 = arith.constant 0 : index
    %1 = vector.load %arg2[%c0_1, %c0_2] : memref<7x32xf32, #tpu.memory_space<vmem>>, vector<7x32xf32>
    %cst = arith.constant dense<0.000000e+00> : vector<96x32xf32>
    %2 = tpu.matmul %0, %1, %cst {dimension_numbers = #tpu.dot_dimension_numbers<[1], [0], [0], [1], [0, 0, 1, 1], [], []>} : vector<96x7xf32>, vector<7x32xf32>, vector<96x32xf32> -> vector<96x32xf32>
    %c0_3 = arith.constant 0 : index
    %c0_4 = arith.constant 0 : index
    %3 = vector.load %arg4[%c0_3, %c0_4] : memref<96x32xf32, #tpu.memory_space<vmem>>, vector<96x32xf32>
    %4 = arith.addf %2, %3 : vector<96x32xf32>
    %c0_5 = arith.constant 0 : index
    %c0_6 = arith.constant 0 : index
    %5 = vector.load %arg6[%c0_5, %c0_6] : memref<96x32xf32, #tpu.memory_space<vmem>>, vector<96x32xf32>
    tpu.vector_store %arg6[%c0_5, %c0_6], %4 {strides = array<i32>} : memref<96x32xf32, #tpu.memory_space<vmem>>, vector<96x32xf32>,
    %c0_7 = arith.constant 0 : index
    %c0_8 = arith.constant 0 : index
    %6 = vector.load %arg3[%c0_7, %c0_8] : memref<40x96xf32, #tpu.memory_space<vmem>>, vector<40x96xf32>
    %cst_9 = arith.constant dense<0.000000e+00> : vector<40x32xf32>
    %7 = tpu.matmul %6, %2, %cst_9 {dimension_numbers = #tpu.dot_dimension_numbers<[1], [0], [0], [1], [0, 0, 1, 1], [], []>} : vector<40x96xf32>, vector<96x32xf32>, vector<40x32xf32> -> vector<40x32xf32>
    %c0_10 = arith.constant 0 : index
    %c0_11 = arith.constant 0 : index
    %8 = vector.load %arg5[%c0_10, %c0_11] : memref<40x32xf32, #tpu.memory_space<vmem>>, vector<40x32xf32>
    %9 = arith.addf %7, %8 : vector<40x32xf32>
    %c0_12 = arith.constant 0 : index
    %c0_13 = arith.constant 0 : index
    %10 = vector.load %arg7[%c0_12, %c0_13] : memref<40x32xf32, #tpu.memory_space<vmem>>, vector<40x32xf32>
    tpu.vector_store %arg7[%c0_12, %c0_13], %9 {strides = array<i32>} : memref<40x32xf32, #tpu.memory_space<vmem>>, vector<40x32xf32>,
    return
  }
  func.func @transform_0(%arg0: i32) -> (i32, i32) {
    %c0_i32 = arith.constant 0 : i32
    %c0_i32_0 = arith.constant 0 : i32
    return %arg0, %c0_i32 : i32, i32
  }
  func.func @transform_1(%arg0: i32) -> (i32, i32) {
    %c0_i32 = arith.constant 0 : i32
    %c0_i32_0 = arith.constant 0 : i32
    %c0_i32_1 = arith.constant 0 : i32
    return %c0_i32, %c0_i32_0 : i32, i32
  }
  func.func @transform_2(%arg0: i32) -> (i32, i32) {
    %c0_i32 = arith.constant 0 : i32
    %c0_i32_0 = arith.constant 0 : i32
    %c0_i32_1 = arith.constant 0 : i32
    return %c0_i32, %c0_i32_0 : i32, i32
  }
  func.func @transform_3(%arg0: i32) -> (i32, i32) {
    %c0_i32 = arith.constant 0 : i32
    %c0_i32_0 = arith.constant 0 : i32
    %c0_i32_1 = arith.constant 0 : i32
    return %c0_i32, %c0_i32_0 : i32, i32
  }
  func.func @transform_4(%arg0: i32) -> (i32, i32) {
    %c0_i32 = arith.constant 0 : i32
    %c0_i32_0 = arith.constant 0 : i32
    %c0_i32_1 = arith.constant 0 : i32
    return %c0_i32, %c0_i32_0 : i32, i32
  }
  func.func @transform_5(%arg0: i32) -> (i32, i32) {
    %c0_i32 = arith.constant 0 : i32
    %c0_i32_0 = arith.constant 0 : i32
    return %arg0, %c0_i32 : i32, i32
  }
  func.func @transform_6(%arg0: i32) -> (i32, i32) {
    %c0_i32 = arith.constant 0 : i32
    %c0_i32_0 = arith.constant 0 : i32
    return %arg0, %c0_i32 : i32, i32
  }
}

</mosaic_0001>

<llo_original>
// kernel: tpu_custom_call.1
$region0: #{tpu_custom_call.1}
  #allocation0 [shape = 'u32[]', space=smem, size = 0x4, offset = 0x4, fixed_abs, tag = 'smem constant byte address 0x4 - core index']
  #allocation1 [shape = 'u32[144,128]{1,0:T(1,128)}', space=vmem, size = 0x12000, scoped, tag = 'internal scratch']
  %s0 = inlined_call_operand.vmem [shape: f32[96,7], index: 0, kind: input, shape index: {}]
  %s1 = inlined_call_operand.vmem [shape: f32[7,32], index: 1, kind: input, shape index: {}]
  %s2 = inlined_call_operand.vmem [shape: f32[40,96], index: 2, kind: input, shape index: {}]
  %s3 = inlined_call_operand.vmem [shape: f32[96,32], index: 3, kind: input, shape index: {}]
  %s4 = inlined_call_operand.vmem [shape: f32[40,32], index: 4, kind: input, shape index: {}]
  %s5 = inlined_call_operand.vmem [shape: f32[96,32], index: 5, kind: output, shape index: {0}]
  %s6 = inlined_call_operand.vmem [shape: f32[40,32], index: 6, kind: output, shape index: {1}]
  %7 = xla_tuple %s5, %s6
  %s8 = sld [smem:[#allocation0]]
  $region38: #{tpu_custom_call.1} parent=0
    _
  %s10 = ssub.s32 1, %s8
  %s11 = scalar_select 0, %s10, %s8
  // Predicated region
  $region2: #{tpu_custom_call.1} parent=0 // pred_check
    _
  $region3: #{tpu_custom_call.1} parent=0 // pred_check_branch
    %13 = sbr.rel (0) target = $region5
  $region4: #{tpu_custom_call.1} parent=0 // pred_region
    _
  $region5: #{tpu_custom_call.1} parent=0 // pred_fallthru
    _
  // Predicated region
  $region6: #{tpu_custom_call.1} parent=0 // pred_check
    _
  $region7: #{tpu_custom_call.1} parent=0 // pred_check_branch
    %15 = sbr.rel (0) target = $region9
  $region8: #{tpu_custom_call.1} parent=0 // pred_region
    _
  $region9: #{tpu_custom_call.1} parent=0 // pred_fallthru
    _
  // Predicated region
  $region10: #{tpu_custom_call.1} parent=0 // pred_check
    _
  $region11: #{tpu_custom_call.1} parent=0 // pred_check_branch
    %17 = sbr.rel (0) target = $region13
  $region12: #{tpu_custom_call.1} parent=0 // pred_region
    _
  $region13: #{tpu_custom_call.1} parent=0 // pred_fallthru
    _
  // Predicated region
  $region14: #{tpu_custom_call.1} parent=0 // pred_check
    _
  $region15: #{tpu_custom_call.1} parent=0 // pred_check_branch
    %19 = sbr.rel (0) target = $region17
  $region16: #{tpu_custom_call.1} parent=0 // pred_region
    _
  $region17: #{tpu_custom_call.1} parent=0 // pred_fallthru
    _
  // Predicated region
  $region18: #{tpu_custom_call.1} parent=0 // pred_check
    _
  $region19: #{tpu_custom_call.1} parent=0 // pred_check_branch
    %21 = sbr.rel (0) target = $region21
  $region20: #{tpu_custom_call.1} parent=0 // pred_region
    _
  $region21: #{tpu_custom_call.1} parent=0 // pred_fallthru
    _
  %v22 = vld [vmem:[%s0] sm:$0xff]
  %v23 = vld [vmem:[%s0 + $0x8] sm:$0xff]
  %v24 = vld [vmem:[%s0 + $0x10] sm:$0xff]
  %v25 = vld [vmem:[%s0 + $0x18] sm:$0xff]
  %v26 = vld [vmem:[%s0 + $0x20] sm:$0xff]
  %v27 = vld [vmem:[%s0 + $0x28] sm:$0xff]
  %v28 = vld [vmem:[%s0 + $0x30] sm:$0xff]
  %v29 = vld [vmem:[%s0 + $0x38] sm:$0xff]
  %v30 = vld [vmem:[%s0 + $0x40] sm:$0xff]
  %v31 = vld [vmem:[%s0 + $0x48] sm:$0xff]
  %v32 = vld [vmem:[%s0 + $0x50] sm:$0xff]
  %v33 = vld [vmem:[%s0 + $0x58] sm:$0xff]
  %v34 = vld [vmem:[%s1] sm:$0x7f]
  %vm35 = vcmask 56320
  %v37 = vsel %vm35, %v22, 0
  %v40 = vsel %vm35, %v23, 0
  %v43 = vsel %vm35, %v24, 0
  %v46 = vsel %vm35, %v25, 0
  %v49 = vsel %vm35, %v26, 0
  %v52 = vsel %vm35, %v27, 0
  %v55 = vsel %vm35, %v28, 0
  %v58 = vsel %vm35, %v29, 0
  %v61 = vsel %vm35, %v30, 0
  %v64 = vsel %vm35, %v31, 0
  %v67 = vsel %vm35, %v32, 0
  %v70 = vsel %vm35, %v33, 0
  %vm72 = vcmask 1046528
  %v74 = vsel %vm72, %v34, 0
  %76 = vmatprep.subr.mxu0 0.0
  %77 = vmatpush1.msra.mxu0 %v74
  %78 = vmatprep.subr.mxu0 0.0
  %79 = vmatpush1.msra.mxu0 0.0
  %80 = vmatprep.subr.mxu0 0.0
  %81 = vmatpush1.msra.mxu0 0.0
  %82 = vmatprep.subr.mxu0 0.0
  %83 = vmatpush1.msra.mxu0 0.0
  %84 = vmatprep.subr.mxu0 0.0
  %85 = vmatpush1.msra.mxu0 0.0
  %86 = vmatprep.subr.mxu0 0.0
  %87 = vmatpush1.msra.mxu0 0.0
  %88 = vmatprep.subr.mxu0 0.0
  %89 = vmatpush1.msra.mxu0 0.0
  %90 = vmatprep.subr.mxu0 0.0
  %91 = vmatpush1.msra.mxu0 0.0
  %92 = vmatprep.subr.mxu0 0.0
  %93 = vmatpush1.msra.mxu0 0.0
  %94 = vmatprep.subr.mxu0 0.0
  %95 = vmatpush1.msra.mxu0 0.0
  %96 = vmatprep.subr.mxu0 0.0
  %97 = vmatpush1.msra.mxu0 0.0
  %98 = vmatprep.subr.mxu0 0.0
  %99 = vmatpush1.msra.mxu0 0.0
  %100 = vmatprep.subr.mxu0 0.0
  %101 = vmatpush1.msra.mxu0 0.0
  %102 = vmatprep.subr.mxu0 0.0
  %103 = vmatpush1.msra.mxu0 0.0
  %104 = vmatprep.subr.mxu0 0.0
  %105 = vmatpush1.msra.mxu0 0.0
  %106 = vmatprep.subr.mxu0 0.0
  %107 = vmatpush1.msra.mxu0 0.0
  %108 = vmatprep.subr.mxu0 0.0
  %109 = vmatpush1.msra.mxu0 0.0
  %110 = vmatprep.subr.mxu0 0.0
  %111 = vmatpush1.msra.mxu0 0.0
  %112 = vmatprep.subr.mxu0 0.0
  %113 = vmatpush1.msra.mxu0 0.0
  %114 = vmatprep.subr.mxu0 0.0
  %115 = vmatpush1.msra.mxu0 0.0
  %116 = vmatprep.subr.mxu0 0.0
  %117 = vmatpush1.msra.mxu0 0.0
  %118 = vmatprep.subr.mxu0 0.0
  %119 = vmatpush1.msra.mxu0 0.0
  %120 = vmatprep.subr.mxu0 0.0
  %121 = vmatpush1.msra.mxu0 0.0
  %122 = vmatprep.subr.mxu0 0.0
  %123 = vmatpush1.msra.mxu0 0.0
  %124 = vmatprep.subr.mxu0 0.0
  %125 = vmatpush1.msra.mxu0 0.0
  %126 = vmatprep.subr.mxu0 0.0
  %127 = vmatpush1.msra.mxu0 0.0
  %128 = vmatprep.subr.mxu0 0.0
  %129 = vmatpush1.msra.mxu0 0.0
  %130 = vmatprep.subr.mxu0 0.0
  %131 = vmatpush1.msra.mxu0 0.0
  %132 = vmatprep.subr.mxu0 0.0
  %133 = vmatpush1.msra.mxu0 0.0
  %134 = vmatprep.subr.mxu0 0.0
  %135 = vmatpush1.msra.mxu0 0.0
  %136 = vmatprep.subr.mxu0 0.0
  %137 = vmatpush1.msra.mxu0 0.0
  %138 = vmatprep.subr.mxu0 0.0
  %139 = vmatpush1.msra.mxu0 0.0
  %140 = vmatprep.mubr.f32.mxu0 0.0
  %141 = vmatmul.mubr.f32.gmra.mrb[0].mxu0 %v37
  %v142 = vpop.f32.mrb[0].mxu0
  %v143 = vadd.f32 0.0, %v142
  %v144 = vpop.f32.mrb[0].mxu0
  %145 = vmatprep.mubr.f32.mxu0 0.0
  %146 = vmatmul.mubr.f32.gmra.mrb[0].mxu0 %v40
  %v147 = vpop.f32.mrb[0].mxu0
  %v148 = vadd.f32 0.0, %v147
  %v149 = vpop.f32.mrb[0].mxu0
  %150 = vmatprep.mubr.f32.mxu0 0.0
  %151 = vmatmul.mubr.f32.gmra.mrb[0].mxu0 %v43
  %v152 = vpop.f32.mrb[0].mxu0
  %v153 = vadd.f32 0.0, %v152
  %v154 = vpop.f32.mrb[0].mxu0
  %155 = vmatprep.mubr.f32.mxu0 0.0
  %156 = vmatmul.mubr.f32.gmra.mrb[0].mxu0 %v46
  %v157 = vpop.f32.mrb[0].mxu0
  %v158 = vadd.f32 0.0, %v157
  %v159 = vpop.f32.mrb[0].mxu0
  %160 = vmatprep.mubr.f32.mxu0 0.0
  %161 = vmatmul.mubr.f32.gmra.mrb[0].mxu0 %v49
  %v162 = vpop.f32.mrb[0].mxu0
  %v163 = vadd.f32 0.0, %v162
  %v164 = vpop.f32.mrb[0].mxu0
  %165 = vmatprep.mubr.f32.mxu0 0.0
  %166 = vmatmul.mubr.f32.gmra.mrb[0].mxu0 %v52
  %v167 = vpop.f32.mrb[0].mxu0
  %v168 = vadd.f32 0.0, %v167
  %v169 = vpop.f32.mrb[0].mxu0
  %170 = vmatprep.mubr.f32.mxu0 0.0
  %171 = vmatmul.mubr.f32.gmra.mrb[0].mxu0 %v55
  %v172 = vpop.f32.mrb[0].mxu0
  %v173 = vadd.f32 0.0, %v172
  %v174 = vpop.f32.mrb[0].mxu0
  %175 = vmatprep.mubr.f32.mxu0 0.0
  %176 = vmatmul.mubr.f32.gmra.mrb[0].mxu0 %v58
  %v177 = vpop.f32.mrb[0].mxu0
  %v178 = vadd.f32 0.0, %v177
  %v179 = vpop.f32.mrb[0].mxu0
  %180 = vmatprep.mubr.f32.mxu0 0.0
  %181 = vmatmul.mubr.f32.gmra.mrb[0].mxu0 %v61
  %v182 = vpop.f32.mrb[0].mxu0
  %v183 = vadd.f32 0.0, %v182
  %v184 = vpop.f32.mrb[0].mxu0
  %185 = vmatprep.mubr.f32.mxu0 0.0
  %186 = vmatmul.mubr.f32.gmra.mrb[0].mxu0 %v64
  %v187 = vpop.f32.mrb[0].mxu0
  %v188 = vadd.f32 0.0, %v187
  %v189 = vpop.f32.mrb[0].mxu0
  %190 = vmatprep.mubr.f32.mxu0 0.0
  %191 = vmatmul.mubr.f32.gmra.mrb[0].mxu0 %v67
  %v192 = vpop.f32.mrb[0].mxu0
  %v193 = vadd.f32 0.0, %v192
  %v194 = vpop.f32.mrb[0].mxu0
  %195 = vmatprep.mubr.f32.mxu0 0.0
  %196 = vmatmul.mubr.f32.gmra.mrb[0].mxu0 %v70
  %v197 = vpop.f32.mrb[0].mxu0
  %v198 = vadd.f32 0.0, %v197
  %v199 = vpop.f32.mrb[0].mxu0
  %200 = vdwg.mxu0
  %v201 = vld [vmem:[%s3] sm:$0xff]
  %v202 = vld [vmem:[%s3 + $0x8] sm:$0xff]
  %v203 = vld [vmem:[%s3 + $0x10] sm:$0xff]
  %v204 = vld [vmem:[%s3 + $0x18] sm:$0xff]
  %v205 = vld [vmem:[%s3 + $0x20] sm:$0xff]
  %v206 = vld [vmem:[%s3 + $0x28] sm:$0xff]
  %v207 = vld [vmem:[%s3 + $0x30] sm:$0xff]
  %v208 = vld [vmem:[%s3 + $0x38] sm:$0xff]
  %v209 = vld [vmem:[%s3 + $0x40] sm:$0xff]
  %v210 = vld [vmem:[%s3 + $0x48] sm:$0xff]
  %v211 = vld [vmem:[%s3 + $0x50] sm:$0xff]
  %v212 = vld [vmem:[%s3 + $0x58] sm:$0xff]
  %v213 = vadd.f32 %v143, %v201
  %v214 = vadd.f32 %v148, %v202
  %v215 = vadd.f32 %v153, %v203
  %v216 = vadd.f32 %v158, %v204
  %v217 = vadd.f32 %v163, %v205
  %v218 = vadd.f32 %v168, %v206
  %v219 = vadd.f32 %v173, %v207
  %v220 = vadd.f32 %v178, %v208
  %v221 = vadd.f32 %v183, %v209
  %v222 = vadd.f32 %v188, %v210
  %v223 = vadd.f32 %v193, %v211
  %v224 = vadd.f32 %v198, %v212
  %vm225 = vcmask 261120
  %226 = vst.msk [vmem:[%s5] sm:$0xff] %vm225, %v213
  %227 = vst.msk [vmem:[%s5 + $0x8] sm:$0xff] %vm225, %v214
  %228 = vst.msk [vmem:[%s5 + $0x10] sm:$0xff] %vm225, %v215
  %229 = vst.msk [vmem:[%s5 + $0x18] sm:$0xff] %vm225, %v216
  %230 = vst.msk [vmem:[%s5 + $0x20] sm:$0xff] %vm225, %v217
  %231 = vst.msk [vmem:[%s5 + $0x28] sm:$0xff] %vm225, %v218
  %232 = vst.msk [vmem:[%s5 + $0x30] sm:$0xff] %vm225, %v219
  %233 = vst.msk [vmem:[%s5 + $0x38] sm:$0xff] %vm225, %v220
  %234 = vst.msk [vmem:[%s5 + $0x40] sm:$0xff] %vm225, %v221
  %235 = vst.msk [vmem:[%s5 + $0x48] sm:$0xff] %vm225, %v222
  %236 = vst.msk [vmem:[%s5 + $0x50] sm:$0xff] %vm225, %v223
  %237 = vst.msk [vmem:[%s5 + $0x58] sm:$0xff] %vm225, %v224
  %v238 = vld [vmem:[%s2] sm:$0xff]
  %v239 = vld [vmem:[%s2 + $0x8] sm:$0xff]
  %v240 = vld [vmem:[%s2 + $0x10] sm:$0xff]
  %v241 = vld [vmem:[%s2 + $0x18] sm:$0xff]
  %v242 = vld [vmem:[%s2 + $0x20] sm:$0xff]
  %v243 = vld [vmem:[%s4] sm:$0xff]
  %v244 = vld [vmem:[%s4 + $0x8] sm:$0xff]
  %v245 = vld [vmem:[%s4 + $0x10] sm:$0xff]
  %v246 = vld [vmem:[%s4 + $0x18] sm:$0xff]
  %v247 = vld [vmem:[%s4 + $0x20] sm:$0xff]
  %vm248 = vcmask 785408
  %v250 = vsel %vm248, %v238, 0
  %v253 = vsel %vm248, %v239, 0
  %v256 = vsel %vm248, %v240, 0
  %v259 = vsel %vm248, %v241, 0
  %v262 = vsel %vm248, %v242, 0
  %264 = vmatprep.subr.mxu0 0.0
  %265 = vmatpush1.msra.mxu0 %v143
  %266 = vmatprep.subr.mxu0 0.0
  %267 = vmatpush1.msra.mxu0 %v148
  %268 = vmatprep.subr.mxu0 0.0
  %269 = vmatpush1.msra.mxu0 %v153
  %270 = vmatprep.subr.mxu0 0.0
  %271 = vmatpush1.msra.mxu0 %v158
  %272 = vmatprep.subr.mxu0 0.0
  %273 = vmatpush1.msra.mxu0 %v163
  %274 = vmatprep.subr.mxu0 0.0
  %275 = vmatpush1.msra.mxu0 %v168
  %276 = vmatprep.subr.mxu0 0.0
  %277 = vmatpush1.msra.mxu0 %v173
  %278 = vmatprep.subr.mxu0 0.0
  %279 = vmatpush1.msra.mxu0 %v178
  %280 = vmatprep.subr.mxu0 0.0
  %281 = vmatpush1.msra.mxu0 %v183
  %282 = vmatprep.subr.mxu0 0.0
  %283 = vmatpush1.msra.mxu0 %v188
  %284 = vmatprep.subr.mxu0 0.0
  %285 = vmatpush1.msra.mxu0 %v193
  %286 = vmatprep.subr.mxu0 0.0
  %287 = vmatpush1.msra.mxu0 %v198
  %288 = vmatprep.subr.mxu0 0.0
  %289 = vmatpush1.msra.mxu0 0.0
  %290 = vmatprep.subr.mxu0 0.0
  %291 = vmatpush1.msra.mxu0 0.0
  %292 = vmatprep.subr.mxu0 0.0
  %293 = vmatpush1.msra.mxu0 0.0
  %294 = vmatprep.subr.mxu0 0.0
  %295 = vmatpush1.msra.mxu0 0.0
  %296 = vmatprep.subr.mxu0 0.0
  %297 = vmatpush1.msra.mxu0 0.0
  %298 = vmatprep.subr.mxu0 0.0
  %299 = vmatpush1.msra.mxu0 0.0
  %300 = vmatprep.subr.mxu0 0.0
  %301 = vmatpush1.msra.mxu0 0.0
  %302 = vmatprep.subr.mxu0 0.0
  %303 = vmatpush1.msra.mxu0 0.0
  %304 = vmatprep.subr.mxu0 0.0
  %305 = vmatpush1.msra.mxu0 0.0
  %306 = vmatprep.subr.mxu0 0.0
  %307 = vmatpush1.msra.mxu0 0.0
  %308 = vmatprep.subr.mxu0 0.0
  %309 = vmatpush1.msra.mxu0 0.0
  %310 = vmatprep.subr.mxu0 0.0
  %311 = vmatpush1.msra.mxu0 0.0
  %312 = vmatprep.subr.mxu0 0.0
  %313 = vmatpush1.msra.mxu0 0.0
  %314 = vmatprep.subr.mxu0 0.0
  %315 = vmatpush1.msra.mxu0 0.0
  %316 = vmatprep.subr.mxu0 0.0
  %317 = vmatpush1.msra.mxu0 0.0
  %318 = vmatprep.subr.mxu0 0.0
  %319 = vmatpush1.msra.mxu0 0.0
  %320 = vmatprep.subr.mxu0 0.0
  %321 = vmatpush1.msra.mxu0 0.0
  %322 = vmatprep.subr.mxu0 0.0
  %323 = vmatpush1.msra.mxu0 0.0
  %324 = vmatprep.subr.mxu0 0.0
  %325 = vmatpush1.msra.mxu0 0.0
  %326 = vmatprep.subr.mxu0 0.0
  %327 = vmatpush1.msra.mxu0 0.0
  %328 = vmatprep.mubr.f32.mxu0 0.0
  %329 = vmatmul.mubr.f32.gmra.mrb[0].mxu0 %v250
  %v330 = vpop.f32.mrb[0].mxu0
  %v331 = vadd.f32 %v243, %v330
  %v332 = vpop.f32.mrb[0].mxu0
  %333 = vmatprep.mubr.f32.mxu0 0.0
  %334 = vmatmul.mubr.f32.gmra.mrb[0].mxu0 %v253
  %v335 = vpop.f32.mrb[0].mxu0
  %v336 = vadd.f32 %v244, %v335
  %v337 = vpop.f32.mrb[0].mxu0
  %338 = vmatprep.mubr.f32.mxu0 0.0
  %339 = vmatmul.mubr.f32.gmra.mrb[0].mxu0 %v256
  %v340 = vpop.f32.mrb[0].mxu0
  %v341 = vadd.f32 %v245, %v340
  %v342 = vpop.f32.mrb[0].mxu0
  %343 = vmatprep.mubr.f32.mxu0 0.0
  %344 = vmatmul.mubr.f32.gmra.mrb[0].mxu0 %v259
  %v345 = vpop.f32.mrb[0].mxu0
  %v346 = vadd.f32 %v246, %v345
  %v347 = vpop.f32.mrb[0].mxu0
  %348 = vmatprep.mubr.f32.mxu0 0.0
  %349 = vmatmul.mubr.f32.gmra.mrb[0].mxu0 %v262
  %v350 = vpop.f32.mrb[0].mxu0
  %v351 = vadd.f32 %v247, %v350
  %v352 = vpop.f32.mrb[0].mxu0
  %353 = vdwg.mxu0
  %354 = vst.msk [vmem:[%s6] sm:$0xff] %vm225, %v331
  %355 = vst.msk [vmem:[%s6 + $0x8] sm:$0xff] %vm225, %v336
  %356 = vst.msk [vmem:[%s6 + $0x10] sm:$0xff] %vm225, %v341
  %357 = vst.msk [vmem:[%s6 + $0x18] sm:$0xff] %vm225, %v346
  %358 = vst.msk [vmem:[%s6 + $0x20] sm:$0xff] %vm225, %v351
  // Predicated region
  $region22: #{tpu_custom_call.1} parent=0 // pred_check
    _
  $region23: #{tpu_custom_call.1} parent=0 // pred_check_branch
    %360 = sbr.rel (0) target = $region25
  $region24: #{tpu_custom_call.1} parent=0 // pred_region
    _
  $region25: #{tpu_custom_call.1} parent=0 // pred_fallthru
    _
  // Predicated region
  $region26: #{tpu_custom_call.1} parent=0 // pred_check
    _
  $region27: #{tpu_custom_call.1} parent=0 // pred_check_branch
    %362 = sbr.rel (0) target = $region29
  $region28: #{tpu_custom_call.1} parent=0 // pred_region
    _
  $region29: #{tpu_custom_call.1} parent=0 // pred_fallthru
    _
  // Predicated region
  $region30: #{tpu_custom_call.1} parent=0 // pred_check
    _
  $region31: #{tpu_custom_call.1} parent=0 // pred_check_branch
    %364 = sbr.rel (0) target = $region33
  $region32: #{tpu_custom_call.1} parent=0 // pred_region
    _
  $region33: #{tpu_custom_call.1} parent=0 // pred_fallthru
    _
  // Predicated region
  $region34: #{tpu_custom_call.1} parent=0 // pred_check
    _
  $region35: #{tpu_custom_call.1} parent=0 // pred_check_branch
    %366 = sbr.rel (0) target = $region37
  $region36: #{tpu_custom_call.1} parent=0 // pred_region
    _
  $region37: #{tpu_custom_call.1} parent=0 // pred_fallthru
    _

</llo_original>
